<compile_context>
chip_gen: v5e
topology: v5e:2x2
jax: 0.10.0
libtpu: 0.0.40
codegen_flags: <defaults>
</compile_context>

<pallas_src>
import jax
import jax.numpy as jnp
from jax import lax
from jax.experimental import pallas as pl
from jax.experimental.pallas import tpu as pltpu


def youtube_dnn_kernel(ids_ref,          # SMEM (B_pad,) int32 — scalar prefetch
                       emb_hbm,          # HBM  (num_users, D) — pl.ANY, manual gather
                       w1_ref, b1_ref,   # VMEM (D, H1), (1, H1)   resident f32
                       w2_ref, b2_ref,   # VMEM (H1, H2), (1, H2)  resident f32
                       w3_ref,           # VMEM (H2, TN)  streamed (bf16 by default)
                       b3_ref,           # VMEM (1, TN)   streamed f32
                       out_ref,          # VMEM (TB, TN)  logits tile
                       x_scr,            # VMEM (TB, D)   gathered embedding rows
                       h2_all,           # VMEM (NB, TB, H2) cached trunk activations
                       gather_sem):      # single shared DMA semaphore
    n = pl.program_id(0)    # movie tile index (outer: w3 tile fetched once per n)
    i = pl.program_id(1)    # batch tile index (inner)
    TB = x_scr.shape[0]

    @pl.when(n == 0)
    def _compute_trunk():
        # --- Gather TB embedding rows HBM -> VMEM.  All row DMAs share one
        # semaphore; one aggregate wait covers the total byte count. ---
        def _issue(j, carry):
            row = ids_ref[i * TB + j]
            pltpu.make_async_copy(emb_hbm.at[pl.ds(row, 1), :],
                                  x_scr.at[pl.ds(j, 1), :],
                                  gather_sem).start()
            return carry
        lax.fori_loop(0, TB, _issue, 0)
        pltpu.make_async_copy(emb_hbm.at[pl.ds(0, TB), :], x_scr,
                              gather_sem).wait()
        # TODO(synk): prefetch next batch tile's gather during the last movie
        # tile (double-buffer x_scr) to hide gather+trunk latency.

        # --- MLP trunk, computed once per batch tile, cached for all movie
        # tiles.  Dropout is inference-mode identity.
        # TODO(synk): training-mode dropout (PRNG mask) not implemented. ---
        x = x_scr[...]
        h1 = jnp.maximum(
            jnp.dot(x, w1_ref[...], preferred_element_type=jnp.float32)
            + b1_ref[...], 0.0)
        h2 = jnp.maximum(
            jnp.dot(h1, w2_ref[...], preferred_element_type=jnp.float32)
            + b2_ref[...], 0.0)
        h2_all[i] = h2.astype(h2_all.dtype)

    # --- Final Linear: one lane-dense (TB, TN) logits tile per grid step. ---
    logits = jnp.dot(h2_all[i], w3_ref[...],
                     preferred_element_type=jnp.float32) + b3_ref[...]
    out_ref[...] = logits.astype(out_ref.dtype)


def _round_up(x, m):
    return (x + m - 1) // m * m


def youtube_dnn_forward(user_ids, emb_table, params, *,
                        tb=None, tn=None, stream_dtype=jnp.bfloat16):
    """params: list of (W_in_out, b_1_out) tuples for each Linear layer."""
    (w1, b1), (w2, b2), (w3, b3) = params
    B = user_ids.shape[0]
    num_users, D = emb_table.shape
    H1 = w1.shape[1]
    H2 = w2.shape[1]
    M = w3.shape[1]

    # Batch tile: multiple of 8 sublanes, up to 256 (fills MXU M dim on v6e/v7x).
    if tb is None:
        tb = min(_round_up(B, 8), 256)
    tb = _round_up(tb, 8)
    B_pad = _round_up(B, tb)

    # Movie tile: lane-dense multiple of 128, up to 2048 (amortizes per-step
    # pipeline overhead, bigger w3 DMAs).
    if tn is None:
        tn = min(2048, _round_up(M, 128))
    tn = _round_up(tn, 128)
    M_pad = _round_up(M, tn)

    nb = B_pad // tb
    nm = M_pad // tn

    # Clamp ids so padded / bad rows never DMA out of bounds.  Padded batch
    # rows gather row 0 and produce garbage logits that are sliced off below —
    # intentional.
    ids = jnp.clip(user_ids.astype(jnp.int32), 0, num_users - 1)
    if B_pad != B:
        ids = jnp.pad(ids, (0, B_pad - B))

    # In production pre-pad / pre-cast w3 once at model load time; the pad is
    # only traced when M is not tile-aligned.
    w3s = w3.astype(stream_dtype)
    b3s = b3.astype(jnp.float32)
    if M_pad != M:
        w3s = jnp.pad(w3s, ((0, 0), (0, M_pad - M)))
        b3s = jnp.pad(b3s, ((0, 0), (0, M_pad - M)))

    # Right-size the VMEM budget from the actual tile footprint (v7x: 64 MiB/TC).
    itemsize = jnp.dtype(stream_dtype).itemsize
    vmem_bytes = (
        2 * H2 * tn * itemsize              # streamed w3, double-buffered
        + 2 * tn * 4                        # streamed b3, double-buffered
        + 2 * tb * tn * 4                   # output tile, double-buffered
        + (D * H1 + H1 + H1 * H2 + H2) * 4  # resident trunk weights
        + tb * D * 4                        # gathered embeddings
        + nb * tb * H2 * itemsize           # cached h2
    )
    vmem_limit = int(min(max(2 * vmem_bytes, 16 * 1024 * 1024),
                         64 * 1024 * 1024))

    const = lambda arr: pl.BlockSpec(arr.shape, lambda n, i, ids: (0, 0))

    grid_spec = pltpu.PrefetchScalarGridSpec(
        num_scalar_prefetch=1,
        grid=(nm, nb),   # movie OUTER, batch INNER: each w3 tile DMA'd once.
        in_specs=[
            pl.BlockSpec(memory_space=pl.ANY),      # embedding table stays in HBM
            const(w1), const(b1),                   # VMEM-resident trunk weights
            const(w2), const(b2),
            # Streamed final layer (on v5e consider pipeline_mode=pl.Buffered(3)).
            pl.BlockSpec((H2, tn), lambda n, i, ids: (0, n)),
            pl.BlockSpec((1, tn), lambda n, i, ids: (0, n)),
        ],
        out_specs=pl.BlockSpec((tb, tn), lambda n, i, ids: (i, n)),
        scratch_shapes=[
            pltpu.VMEM((tb, D), jnp.float32),       # gathered embedding rows
            pltpu.VMEM((nb, tb, H2), stream_dtype),  # cached trunk activations
            pltpu.SemaphoreType.DMA,                # single shared gather semaphore
        ],
    )

    out = pl.pallas_call(
        youtube_dnn_kernel,
        grid_spec=grid_spec,
        out_shape=jax.ShapeDtypeStruct((B_pad, M_pad), jnp.float32),
        compiler_params=pltpu.CompilerParams(
            # TODO(synk): for single-batch-tile serving on v7x, shard the movie
            # axis across the 2 TensorCores (needs a per-core "first tile seen"
            # guard instead of n == 0 before it can be marked parallel).
            dimension_semantics=("arbitrary", "arbitrary"),
            vmem_limit_bytes=vmem_limit,
        ),
    )(ids, emb_table,
      w1.astype(jnp.float32), b1.astype(jnp.float32),
      w2.astype(jnp.float32), b2.astype(jnp.float32),
      w3s, b3s)

    if B_pad != B or M_pad != M:
        out = out[:B, :M]
    return out


def init_params(key, num_users, num_movies, embedding_dim, hidden_dims):
    """Deterministic init mimicking PyTorch defaults (uniform +-1/sqrt(fan_in);
    embedding ~ N(0,1)).  Weights returned already transposed to (in, out)."""
    keys = jax.random.split(key, 2 * (len(hidden_dims) + 1) + 1)
    emb = jax.random.normal(keys[0], (num_users, embedding_dim), jnp.float32)

    dims = [embedding_dim] + list(hidden_dims) + [num_movies]
    params = []
    k_idx = 1
    for fan_in, fan_out in zip(dims[:-1], dims[1:]):
        bound = 1.0 / jnp.sqrt(jnp.float32(fan_in))
        w = jax.random.uniform(keys[k_idx], (fan_in, fan_out), jnp.float32,
                               -bound, bound)
        b = jax.random.uniform(keys[k_idx + 1], (1, fan_out), jnp.float32,
                               -bound, bound)
        params.append((w, b))
        k_idx += 2
    return emb, params


def reference_forward(user_ids, emb_table, params):
    x = emb_table[user_ids]
    (w1, b1), (w2, b2), (w3, b3) = params
    x = jnp.maximum(x @ w1 + b1, 0.0)
    x = jnp.maximum(x @ w2 + b2, 0.0)
    return x @ w3 + b3


if __name__ == "__main__":
    num_users, num_movies = 64, 128
    embedding_dim, hidden_dims = 32, [64, 32]
    batch = 8

    key = jax.random.PRNGKey(0)
    k_ids, k_params = jax.random.split(key)

    emb_table, params = init_params(k_params, num_users, num_movies,
                                    embedding_dim, hidden_dims)
    user_ids = jax.random.randint(k_ids, (batch,), 0, num_users, jnp.int32)

    ref = reference_forward(user_ids, emb_table, params)

    # f32-streamed path: must match the f32 reference tightly.
    logits_f32 = youtube_dnn_forward(user_ids, emb_table, params,
                                     stream_dtype=jnp.float32)
    jax.block_until_ready(logits_f32)
    assert logits_f32.shape == (batch, num_movies)
    assert jnp.allclose(logits_f32, ref, atol=1e-4, rtol=1e-4)

    # Default bf16-streamed path (production config): relaxed tolerance vs f32.
    logits = youtube_dnn_forward(user_ids, emb_table, params)
    jax.block_until_ready(logits)
    assert logits.shape == (batch, num_movies)
    assert jnp.allclose(logits, ref, atol=3e-2, rtol=3e-2)

    print("KERNEL_OK")
</pallas_src>

<mosaic_0001>
module attributes {stable_mosaic.version = 11 : i64} {
  func.func @youtube_dnn_kernel(%arg0: i32, %arg1: i32, %arg2: memref<8xi32, #tpu.memory_space<smem>>, %arg3: memref<64x32xf32, #tpu.memory_space<any>>, %arg4: memref<32x64xf32, #tpu.memory_space<vmem>>, %arg5: memref<1x64xf32, #tpu.memory_space<vmem>>, %arg6: memref<64x32xf32, #tpu.memory_space<vmem>>, %arg7: memref<1x32xf32, #tpu.memory_space<vmem>>, %arg8: memref<32x128xf32, #tpu.memory_space<vmem>>, %arg9: memref<1x128xf32, #tpu.memory_space<vmem>>, %arg10: memref<8x128xf32, #tpu.memory_space<vmem>>, %arg11: memref<8x32xf32, #tpu.memory_space<vmem>>, %arg12: memref<1x8x32xf32, #tpu.memory_space<vmem>>, %arg13: memref<!tpu.dma_semaphore, #tpu.memory_space<semaphore_mem>>) attributes {dimension_semantics = [#tpu.dimension_semantics<arbitrary>, #tpu.dimension_semantics<arbitrary>], iteration_bounds = array<i64: 1, 1>, scalar_prefetch = 1 : i64, scratch_operands = 3 : i64, tpu.core_type = #tpu.core_type<tc>, window_params = [{}, {pipeline_mode = #tpu.pipeline_mode<synchronous>, transform_indices = @transform_1, window_bounds = array<i64: 32, 64>}, {pipeline_mode = #tpu.pipeline_mode<synchronous>, transform_indices = @transform_2, window_bounds = array<i64: 1, 64>}, {pipeline_mode = #tpu.pipeline_mode<synchronous>, transform_indices = @transform_3, window_bounds = array<i64: 64, 32>}, {pipeline_mode = #tpu.pipeline_mode<synchronous>, transform_indices = @transform_4, window_bounds = array<i64: 1, 32>}, {transform_indices = @transform_5, window_bounds = array<i64: 32, 128>}, {transform_indices = @transform_6, window_bounds = array<i64: 1, 128>}, {transform_indices = @transform_7, window_bounds = array<i64: 8, 128>}]} {
    %c0_i32 = arith.constant 0 : i32
    %0 = arith.cmpi eq, %arg0, %c0_i32 : i32
    %1 = arith.extui %0 : i1 to i32
    %c0_i32_0 = arith.constant 0 : i32
    %2 = arith.cmpi ne, %1, %c0_i32_0 : i32
    scf.if %2 {
      %c0_i32_8 = arith.constant 0 : i32
      %c8_i32 = arith.constant 8 : i32
      %12 = arith.addi %c0_i32_8, %c8_i32 : i32
      %c1_i32 = arith.constant 1 : i32
      scf.for %arg14 = %c0_i32_8 to %12 step %c1_i32  : i32 {
        %c8_i32_28 = arith.constant 8 : i32
        %33 = arith.muli %arg1, %c8_i32_28 : i32
        %34 = arith.addi %33, %arg14 : i32
        %35 = arith.index_cast %34 : i32 to index
        %36 = memref.load %arg2[%35] : memref<8xi32, #tpu.memory_space<smem>>
        %c0_i32_29 = arith.constant 0 : i32
        %37 = tpu.memref_slice %arg3[%36, %c0_i32_29] : memref<64x32xf32, #tpu.memory_space<any>> -> memref<1x32xf32, #tpu.memory_space<any>>
        %c0_i32_30 = arith.constant 0 : i32
        %38 = tpu.memref_slice %arg11[%arg14, %c0_i32_30] : memref<8x32xf32, #tpu.memory_space<vmem>> -> memref<1x32xf32, #tpu.memory_space<vmem>>
        tpu.enqueue_dma source(%37 : memref<1x32xf32, #tpu.memory_space<any>>) target(%38 : memref<1x32xf32, #tpu.memory_space<vmem>>) target_semaphore(%arg13 : memref<!tpu.dma_semaphore, #tpu.memory_space<semaphore_mem>>)
      }
      %c8_i32_9 = arith.constant 8 : i32
      %c0_i32_10 = arith.constant 0 : i32
      %c0_i32_11 = arith.constant 0 : i32
      %13 = tpu.memref_slice %arg3[%c0_i32_10, %c0_i32_11] : memref<64x32xf32, #tpu.memory_space<any>> -> memref<8x32xf32, #tpu.memory_space<any>>
      tpu.wait_dma2 semaphore(%arg13 : memref<!tpu.dma_semaphore, #tpu.memory_space<semaphore_mem>>) src(%13 : memref<8x32xf32, #tpu.memory_space<any>>) dst(%arg11 : memref<8x32xf32, #tpu.memory_space<vmem>>)
      %c0_12 = arith.constant 0 : index
      %c0_13 = arith.constant 0 : index
      %14 = vector.load %arg11[%c0_12, %c0_13] : memref<8x32xf32, #tpu.memory_space<vmem>>, vector<8x32xf32>
      %c0_14 = arith.constant 0 : index
      %c0_15 = arith.constant 0 : index
      %15 = vector.load %arg4[%c0_14, %c0_15] : memref<32x64xf32, #tpu.memory_space<vmem>>, vector<32x64xf32>
      %cst_16 = arith.constant dense<0.000000e+00> : vector<8x64xf32>
      %16 = tpu.matmul %14, %15, %cst_16 {dimension_numbers = #tpu.dot_dimension_numbers<[1], [0], [0], [1], [0, 0, 1, 1], [], []>} : vector<8x32xf32>, vector<32x64xf32>, vector<8x64xf32> -> vector<8x64xf32>
      %c0_17 = arith.constant 0 : index
      %c0_18 = arith.constant 0 : index
      %17 = vector.load %arg5[%c0_17, %c0_18] : memref<1x64xf32, #tpu.memory_space<vmem>>, vector<1x64xf32>
      %18 = vector.broadcast %17 : vector<1x64xf32> to vector<8x64xf32>
      %19 = arith.addf %16, %18 : vector<8x64xf32>
      %cst_19 = arith.constant 0.000000e+00 : f32
      %20 = vector.broadcast %cst_19 : f32 to vector<8x64xf32>
      %21 = arith.maximumf %19, %20 : vector<8x64xf32>
      %c0_20 = arith.constant 0 : index
      %c0_21 = arith.constant 0 : index
      %22 = vector.load %arg6[%c0_20, %c0_21] : memref<64x32xf32, #tpu.memory_space<vmem>>, vector<64x32xf32>
      %cst_22 = arith.constant dense<0.000000e+00> : vector<8x32xf32>
      %23 = tpu.matmul %21, %22, %cst_22 {dimension_numbers = #tpu.dot_dimension_numbers<[1], [0], [0], [1], [0, 0, 1, 1], [], []>} : vector<8x64xf32>, vector<64x32xf32>, vector<8x32xf32> -> vector<8x32xf32>
      %c0_23 = arith.constant 0 : index
      %c0_24 = arith.constant 0 : index
      %24 = vector.load %arg7[%c0_23, %c0_24] : memref<1x32xf32, #tpu.memory_space<vmem>>, vector<1x32xf32>
      %25 = vector.broadcast %24 : vector<1x32xf32> to vector<8x32xf32>
      %26 = arith.addf %23, %25 : vector<8x32xf32>
      %cst_25 = arith.constant 0.000000e+00 : f32
      %27 = vector.broadcast %cst_25 : f32 to vector<8x32xf32>
      %28 = arith.maximumf %26, %27 : vector<8x32xf32>
      %29 = arith.index_cast %arg1 : i32 to index
      %c0_26 = arith.constant 0 : index
      %c0_27 = arith.constant 0 : index
      %30 = vector.load %arg12[%29, %c0_26, %c0_27] : memref<1x8x32xf32, #tpu.memory_space<vmem>>, vector<1x8x32xf32>
      %31 = vector.shape_cast %30 : vector<1x8x32xf32> to vector<8x32xf32>
      %32 = vector.shape_cast %28 : vector<8x32xf32> to vector<1x8x32xf32>
      tpu.vector_store %arg12[%29, %c0_26, %c0_27], %32 {strides = array<i32>} : memref<1x8x32xf32, #tpu.memory_space<vmem>>, vector<1x8x32xf32>,
    } else {
    }
    %3 = arith.index_cast %arg1 : i32 to index
    %c0 = arith.constant 0 : index
    %c0_1 = arith.constant 0 : index
    %4 = vector.load %arg12[%3, %c0, %c0_1] : memref<1x8x32xf32, #tpu.memory_space<vmem>>, vector<1x8x32xf32>
    %5 = vector.shape_cast %4 : vector<1x8x32xf32> to vector<8x32xf32>
    %c0_2 = arith.constant 0 : index
    %c0_3 = arith.constant 0 : index
    %6 = vector.load %arg8[%c0_2, %c0_3] : memref<32x128xf32, #tpu.memory_space<vmem>>, vector<32x128xf32>
    %cst = arith.constant dense<0.000000e+00> : vector<8x128xf32>
    %7 = tpu.matmul %5, %6, %cst {dimension_numbers = #tpu.dot_dimension_numbers<[1], [0], [0], [1], [0, 0, 1, 1], [], []>} : vector<8x32xf32>, vector<32x128xf32>, vector<8x128xf32> -> vector<8x128xf32>
    %c0_4 = arith.constant 0 : index
    %c0_5 = arith.constant 0 : index
    %8 = vector.load %arg9[%c0_4, %c0_5] : memref<1x128xf32, #tpu.memory_space<vmem>>, vector<1x128xf32>
    %9 = vector.broadcast %8 : vector<1x128xf32> to vector<8x128xf32>
    %10 = arith.addf %7, %9 : vector<8x128xf32>
    %c0_6 = arith.constant 0 : index
    %c0_7 = arith.constant 0 : index
    %11 = vector.load %arg10[%c0_6, %c0_7] : memref<8x128xf32, #tpu.memory_space<vmem>>, vector<8x128xf32>
    tpu.vector_store %arg10[%c0_6, %c0_7], %10 {strides = array<i32>} : memref<8x128xf32, #tpu.memory_space<vmem>>, vector<8x128xf32>,
    return
  }
  func.func @transform_1(%arg0: i32, %arg1: i32, %arg2: memref<8xi32, #tpu.memory_space<smem>>) -> (i32, i32) {
    %c0_i32 = arith.constant 0 : i32
    %c0_i32_0 = arith.constant 0 : i32
    %c0_i32_1 = arith.constant 0 : i32
    return %c0_i32, %c0_i32_0 : i32, i32
  }
  func.func @transform_2(%arg0: i32, %arg1: i32, %arg2: memref<8xi32, #tpu.memory_space<smem>>) -> (i32, i32) {
    %c0_i32 = arith.constant 0 : i32
    %c0_i32_0 = arith.constant 0 : i32
    %c0_i32_1 = arith.constant 0 : i32
    return %c0_i32, %c0_i32_0 : i32, i32
  }
  func.func @transform_3(%arg0: i32, %arg1: i32, %arg2: memref<8xi32, #tpu.memory_space<smem>>) -> (i32, i32) {
    %c0_i32 = arith.constant 0 : i32
    %c0_i32_0 = arith.constant 0 : i32
    %c0_i32_1 = arith.constant 0 : i32
    return %c0_i32, %c0_i32_0 : i32, i32
  }
  func.func @transform_4(%arg0: i32, %arg1: i32, %arg2: memref<8xi32, #tpu.memory_space<smem>>) -> (i32, i32) {
    %c0_i32 = arith.constant 0 : i32
    %c0_i32_0 = arith.constant 0 : i32
    %c0_i32_1 = arith.constant 0 : i32
    return %c0_i32, %c0_i32_0 : i32, i32
  }
  func.func @transform_5(%arg0: i32, %arg1: i32, %arg2: memref<8xi32, #tpu.memory_space<smem>>) -> (i32, i32) {
    %c0_i32 = arith.constant 0 : i32
    %c0_i32_0 = arith.constant 0 : i32
    return %c0_i32, %arg0 : i32, i32
  }
  func.func @transform_6(%arg0: i32, %arg1: i32, %arg2: memref<8xi32, #tpu.memory_space<smem>>) -> (i32, i32) {
    %c0_i32 = arith.constant 0 : i32
    %c0_i32_0 = arith.constant 0 : i32
    return %c0_i32, %arg0 : i32, i32
  }
  func.func @transform_7(%arg0: i32, %arg1: i32, %arg2: memref<8xi32, #tpu.memory_space<smem>>) -> (i32, i32) {
    %c0_i32 = arith.constant 0 : i32
    return %arg1, %arg0 : i32, i32
  }
}

</mosaic_0001>

<llo_original>
// kernel: tpu_custom_call.1
$region0: #{tpu_custom_call.1}
  #allocation0 [shape = 'u32[]', space=smem, size = 0x4, offset = 0x4, fixed_abs, tag = 'smem constant byte address 0x4 - core index']
  #allocation1 [shape = 'u32[72,128]{1,0:T(1,128)}', space=vmem, size = 0x9000, scoped, tag = 'internal scratch']
  #allocation2 [shape = 'f32[8,32]{1,0:T(8,128)}', space=vmem, size = 0x1000, scoped, tag = 'scratch operand']
  #allocation3 [shape = 'f32[1,8,32]{2,1,0:T(8,128)}', space=vmem, size = 0x1000, scoped, tag = 'scratch operand']
  #allocation4 [shape = 's32[1]{0}', space=sflag, size = 0x4, scoped, tag = 'scratch operand']
  #allocation5 [shape = 's32[1]{0}', space=sflag, size = 0x4, scoped, tag = 'scoped memory for tpu_custom_call.1']
  #allocation6 [shape = 'u8[512]{0}', space=smem, size = 0x200, scoped, tag = 'prefetched SMEM operand 0']
  #allocation9 [shape = 's32[]', space=sflag, size = 0x4, offset = 0, fixed_abs, tag = 'sflag constant byte address 0x0 - dummy sync flag']
  %s0 = inlined_call_operand.vmem [shape: s32[8], index: 0, kind: input, shape index: {}]
  %s1 = inlined_call_operand.vmem [shape: f32[64,32], index: 1, kind: input, shape index: {}]
  %s2 = inlined_call_operand.vmem [shape: f32[32,64], index: 2, kind: input, shape index: {}]
  %s3 = inlined_call_operand.vmem [shape: f32[1,64], index: 3, kind: input, shape index: {}]
  %s4 = inlined_call_operand.vmem [shape: f32[64,32], index: 4, kind: input, shape index: {}]
  %s5 = inlined_call_operand.vmem [shape: f32[1,32], index: 5, kind: input, shape index: {}]
  %s6 = inlined_call_operand.vmem [shape: f32[32,128], index: 6, kind: input, shape index: {}]
  %s7 = inlined_call_operand.vmem [shape: f32[1,128], index: 7, kind: input, shape index: {}]
  %s8 = inlined_call_operand.hbm [shape: f32[8,128], index: 8, kind: output, shape index: {}]
  %s9 = sld [smem:[#allocation0]]
  $region75: #{tpu_custom_call.1} parent=0
    _
  %s11 = ssub.s32 1, %s9
  %s12 = scalar_select 0, %s11, %s9
  %s14 = sshll.u32 %s0, 4
  %s15 = int_to_ptr.vmem [resolvable:$true] %s14
  %17 = dma.vmem_to_smem %s15, 16, [#allocation6], [#allocation5]
  %19 = dma.done [#allocation5], 16
  %20 = sfence
  $region1: #{tpu_custom_call.1} parent=0
    #allocation7 [shape = 'u8[4096]{0}', space=vmem, size = 0x1000, scoped, tag = 'output window, operand 0, single buffered']
    #allocation8 [shape = 's32[1]{0}', space=sflag, size = 0x4, scoped, tag = 'scoped memory for tpu_custom_call.1']
    %21 = vsyncpa [#allocation8], 0
    // Predicated region
    $region2: #{tpu_custom_call.1} parent=1 // pred_check
      _
    $region3: #{tpu_custom_call.1} parent=1 // pred_check_branch
      %23 = sbr.rel (0) target = $region5
    $region4: #{tpu_custom_call.1} parent=1 // pred_region
      _
    $region5: #{tpu_custom_call.1} parent=1 // pred_fallthru
      _
    // Predicated region
    $region6: #{tpu_custom_call.1} parent=1 // pred_check
      _
    $region7: #{tpu_custom_call.1} parent=1 // pred_check_branch
      %25 = sbr.rel (0) target = $region9
    $region8: #{tpu_custom_call.1} parent=1 // pred_region
      _
    $region9: #{tpu_custom_call.1} parent=1 // pred_fallthru
      _
    // Predicated region
    $region10: #{tpu_custom_call.1} parent=1 // pred_check
      _
    $region11: #{tpu_custom_call.1} parent=1 // pred_check_branch
      %27 = sbr.rel (0) target = $region13
    $region12: #{tpu_custom_call.1} parent=1 // pred_region
      _
    $region13: #{tpu_custom_call.1} parent=1 // pred_fallthru
      _
    // Predicated region
    $region14: #{tpu_custom_call.1} parent=1 // pred_check
      _
    $region15: #{tpu_custom_call.1} parent=1 // pred_check_branch
      %29 = sbr.rel (0) target = $region17
    $region16: #{tpu_custom_call.1} parent=1 // pred_region
      _
    $region17: #{tpu_custom_call.1} parent=1 // pred_fallthru
      _
    // Predicated region
    $region18: #{tpu_custom_call.1} parent=1 // pred_check
      _
    $region19: #{tpu_custom_call.1} parent=1 // pred_check_branch
      %31 = sbr.rel (0) target = $region21
    $region20: #{tpu_custom_call.1} parent=1 // pred_region
      _
    $region21: #{tpu_custom_call.1} parent=1 // pred_fallthru
      _
    // Predicated region
    $region22: #{tpu_custom_call.1} parent=1 // pred_check
      _
    $region23: #{tpu_custom_call.1} parent=1 // pred_check_branch
      %33 = sbr.rel (0) target = $region25
    $region24: #{tpu_custom_call.1} parent=1 // pred_region
      _
    $region25: #{tpu_custom_call.1} parent=1 // pred_fallthru
      _
    %p34 = scmp.eq.s32.totalorder 0, 0
    // Predicated region
    $region26: #{tpu_custom_call.1} parent=1 // pred_check
      %p35 = pneg %p34
    $region27: #{tpu_custom_call.1} parent=1 // pred_check_branch
      %37 = sbr.rel (%p35) target = $region29
    $region28: #{tpu_custom_call.1} parent=1 // pred_region
      loop: start=0, step=1, limit=8
      $region30: #{tpu_custom_call.1} parent=28 // loop_pre_header
        _
      $region31: #{tpu_custom_call.1} parent=28 // loop_header
        %s39 = sphi 0, %s43
        %p40 = scmp.ge.s32.totalorder %s39, 8
      $region32: #{tpu_custom_call.1} parent=28 // loop_header_branch
        %42 = sbr.rel (%p40) target = $region36
      $region33: #{tpu_custom_call.1} parent=28 // loop_body
        %s44 = smul.u32 0, 8
        %s45 = sadd.s32 %s44, %s39
        %s46 = sld [smem:[#allocation6 + %s45]]
        %s47 = scalar_lea.vmem %s1, %s46
        %s48 = scalar_lea.vmem [#allocation2], %s39
        // Predicated region
        $region37: #{tpu_custom_call.1} parent=33 // pred_check
          _
        $region38: #{tpu_custom_call.1} parent=33 // pred_check_branch
          %50 = sbr.rel target = $region40
        $region39: #{tpu_custom_call.1} parent=33 // pred_region
          // Predicated region
          $region52: #{tpu_custom_call.1} parent=39 // pred_check
            _
          $region53: #{tpu_custom_call.1} parent=39 // pred_check_branch
            %66 = sbr.rel (0) target = $region55
          $region54: #{tpu_custom_call.1} parent=39 // pred_region
            %s68 = ssub.s32 2, 1
            loop: start=0, step=1, limit=1
            $region56: #{tpu_custom_call.1} parent=54 // loop_pre_header
              _
            $region57: #{tpu_custom_call.1} parent=54 // loop_header
              %s70 = sphi 0, %s74
              %p71 = scmp.ge.s32.totalorder %s70, 1
              %s75 = sphi %s47, %s47
              %s76 = sphi %s48, %s48
            $region58: #{tpu_custom_call.1} parent=54 // loop_header_branch
              %73 = sbr.rel (%p71) target = $region62
            $region59: #{tpu_custom_call.1} parent=54 // loop_body
              %v77 = vld [vmem:[%s75] sm:%s68]
              %78 = vst [vmem:[%s76] sm:%s68] %v77
            $region60: #{tpu_custom_call.1} parent=54 // loop_footer
              %s74 = sadd.s32 1, %s70
            $region61: #{tpu_custom_call.1} parent=54 // loop_footer_branch
              %69 = sbr.rel target = $region57
            $region62: #{tpu_custom_call.1} parent=54 // loop_exit
              _
          $region55: #{tpu_custom_call.1} parent=39 // pred_fallthru
            _
        $region40: #{tpu_custom_call.1} parent=33 // pred_fallthru
          _
        // Predicated region
        $region41: #{tpu_custom_call.1} parent=33 // pred_check
          _
        $region42: #{tpu_custom_call.1} parent=33 // pred_check_branch
          %52 = sbr.rel (0) target = $region44
        $region43: #{tpu_custom_call.1} parent=33 // pred_region
          %s54 = ssub.s32 2, 1
          loop: start=0, step=1, limit=1
          $region45: #{tpu_custom_call.1} parent=43 // loop_pre_header
            _
          $region46: #{tpu_custom_call.1} parent=43 // loop_header
            %s56 = sphi 0, %s60
            %p57 = scmp.ge.s32.totalorder %s56, 1
            %s61 = sphi %s47, %s47
            %s62 = sphi %s48, %s48
          $region47: #{tpu_custom_call.1} parent=43 // loop_header_branch
            %59 = sbr.rel (%p57) target = $region51
          $region48: #{tpu_custom_call.1} parent=43 // loop_body
            %v63 = vld [vmem:[%s61] sm:%s54]
            %64 = vst [vmem:[%s62] sm:%s54] %v63
          $region49: #{tpu_custom_call.1} parent=43 // loop_footer
            %s60 = sadd.s32 1, %s56
          $region50: #{tpu_custom_call.1} parent=43 // loop_footer_branch
            %55 = sbr.rel target = $region46
          $region51: #{tpu_custom_call.1} parent=43 // loop_exit
            _
        $region44: #{tpu_custom_call.1} parent=33 // pred_fallthru
          _
        // Predicated region
        $region63: #{tpu_custom_call.1} parent=33 // pred_check
          _
        $region64: #{tpu_custom_call.1} parent=33 // pred_check_branch
          %81 = sbr.rel (0) target = $region66
        $region65: #{tpu_custom_call.1} parent=33 // pred_region
          %82 = vsyncadd [#allocation4], 16
        $region66: #{tpu_custom_call.1} parent=33 // pred_fallthru
          _
      $region34: #{tpu_custom_call.1} parent=28 // loop_footer
        %s43 = sadd.s32 1, %s39
      $region35: #{tpu_custom_call.1} parent=28 // loop_footer_branch
        %38 = sbr.rel target = $region31
      $region36: #{tpu_custom_call.1} parent=28 // loop_exit
        _
      %s83 = smul.u32 8, 1
      %s84 = sshll.u32 %s83, 4
      %85 = dma.done [#allocation4], %s84
      %v86 = vld [vmem:[#allocation2] sm:$0xff]
      %v87 = vld [vmem:[%s2] sm:$0xff]
      %v88 = vld [vmem:[%s2 + $0x8] sm:$0xff]
      %v89 = vld [vmem:[%s2 + $0x10] sm:$0xff]
      %v90 = vld [vmem:[%s2 + $0x18] sm:$0xff]
      %v91 = vld [vmem:[%s3] sm:$0x1]
      %v93 = vperm.slane %v91, 0
      %vm95 = vcmask 261120
      %v97 = vsel %vm95, %v86, 0
      %99 = vmatpush.msra.mxu0 0.0
      %100 = vmatpush.msra.mxu0 0.0
      %101 = vmatpush.msra.mxu0 0.0
      %102 = vmatpush.msra.mxu0 0.0
      %103 = vmatpush.msra.mxu0 0.0
      %104 = vmatpush.msra.mxu0 0.0
      %105 = vmatpush.msra.mxu0 0.0
      %106 = vmatpush.msra.mxu0 0.0
      %107 = vmatpush.msra.mxu0 0.0
      %108 = vmatpush.msra.mxu0 0.0
      %109 = vmatpush.msra.mxu0 0.0
      %110 = vmatpush.msra.mxu0 0.0
      %111 = vmatpush.msra.mxu0 %v90
      %112 = vmatpush.msra.mxu0 %v89
      %113 = vmatpush.msra.mxu0 %v88
      %114 = vmatpush.msra.mxu0 %v87
      %115 = vmatmul.f32.gmra.mxu0 %v97
      %v116 = vpop.f32.mrf.mxu0
      %v117 = vadd.f32 %v93, %v116
      %118 = vdwg.mxu0
      %v119 = vmax.f32 %v117, 0.0
      %v120 = vld [vmem:[%s4] sm:$0xff]
      %v121 = vld [vmem:[%s4 + $0x8] sm:$0xff]
      %v122 = vld [vmem:[%s4 + $0x10] sm:$0xff]
      %v123 = vld [vmem:[%s4 + $0x18] sm:$0xff]
      %v124 = vld [vmem:[%s4 + $0x20] sm:$0xff]
      %v125 = vld [vmem:[%s4 + $0x28] sm:$0xff]
      %v126 = vld [vmem:[%s4 + $0x30] sm:$0xff]
      %v127 = vld [vmem:[%s4 + $0x38] sm:$0xff]
      %v128 = vld [vmem:[%s5] sm:$0x1]
      %v130 = vperm.slane %v128, 0
      %vm132 = vcmask 523264
      %v134 = vsel %vm132, %v119, 0
      %136 = vmatpush.msra.mxu0 0.0
      %137 = vmatpush.msra.mxu0 0.0
      %138 = vmatpush.msra.mxu0 0.0
      %139 = vmatpush.msra.mxu0 0.0
      %140 = vmatpush.msra.mxu0 0.0
      %141 = vmatpush.msra.mxu0 0.0
      %142 = vmatpush.msra.mxu0 0.0
      %143 = vmatpush.msra.mxu0 0.0
      %144 = vmatpush.msra.mxu0 %v127
      %145 = vmatpush.msra.mxu0 %v126
      %146 = vmatpush.msra.mxu0 %v125
      %147 = vmatpush.msra.mxu0 %v124
      %148 = vmatpush.msra.mxu0 %v123
      %149 = vmatpush.msra.mxu0 %v122
      %150 = vmatpush.msra.mxu0 %v121
      %151 = vmatpush.msra.mxu0 %v120
      %152 = vmatmul.f32.gmra.mxu0 %v134
      %v153 = vpop.f32.mrf.mxu0
      %v154 = vadd.f32 %v130, %v153
      %155 = vdwg.mxu0
      %v156 = vmax.f32 %v154, 0.0
      %s157 = smul.u32 0, 8
      %s158 = scalar_lea.vmem [#allocation3], %s157
      %159 = vst.msk [vmem:[%s158] sm:$0xff] %vm95, %v156
    $region29: #{tpu_custom_call.1} parent=1 // pred_fallthru
      _
    %s160 = smul.u32 0, 8
    %s161 = scalar_lea.vmem [#allocation3], %s160
    %v162 = vld [vmem:[%s161] sm:$0xff]
    %v163 = vld [vmem:[%s6] sm:$0xff]
    %v164 = vld [vmem:[%s6 + $0x8] sm:$0xff]
    %v165 = vld [vmem:[%s6 + $0x10] sm:$0xff]
    %v166 = vld [vmem:[%s6 + $0x18] sm:$0xff]
    %v167 = vld [vmem:[%s7] sm:$0x1]
    %v169 = vperm.slane %v167, 0
    %vm171 = vcmask 261120
    %v173 = vsel %vm171, %v162, 0
    %175 = vmatpush.msra.mxu0 0.0
    %176 = vmatpush.msra.mxu0 0.0
    %177 = vmatpush.msra.mxu0 0.0
    %178 = vmatpush.msra.mxu0 0.0
    %179 = vmatpush.msra.mxu0 0.0
    %180 = vmatpush.msra.mxu0 0.0
    %181 = vmatpush.msra.mxu0 0.0
    %182 = vmatpush.msra.mxu0 0.0
    %183 = vmatpush.msra.mxu0 0.0
    %184 = vmatpush.msra.mxu0 0.0
    %185 = vmatpush.msra.mxu0 0.0
    %186 = vmatpush.msra.mxu0 0.0
    %187 = vmatpush.msra.mxu0 %v166
    %188 = vmatpush.msra.mxu0 %v165
    %189 = vmatpush.msra.mxu0 %v164
    %190 = vmatpush.msra.mxu0 %v163
    %191 = vmatmul.f32.gmra.mxu0 %v173
    %v192 = vpop.f32.mrf.mxu0
    %v193 = vadd.f32 %v169, %v192
    %194 = vdwg.mxu0
    %195 = vst [vmem:[#allocation7] sm:$0xff] %v193
    // Predicated region
    $region67: #{tpu_custom_call.1} parent=1 // pred_check
      _
    $region68: #{tpu_custom_call.1} parent=1 // pred_check_branch
      %197 = sbr.rel (0) target = $region70
    $region69: #{tpu_custom_call.1} parent=1 // pred_region
      %199 = vsyncadd [#allocation8], 0
      %s201 = sshll.u32 [#allocation7], 4
      %s202 = int_to_ptr.vmem [resolvable:$true] %s201
      %s203 = sshll.u32 %s8, 4
      %s204 = int_to_ptr.hbm [resolvable:$true] %s203
      %206 = dma.vmem_to_hbm [thread:$0]  %s202, 128, %s204, [#allocation8]
    $region70: #{tpu_custom_call.1} parent=1 // pred_fallthru
      _
    // Predicated region
    $region71: #{tpu_custom_call.1} parent=1 // pred_check
      _
    $region72: #{tpu_custom_call.1} parent=1 // pred_check_branch
      %208 = sbr.rel (0) target = $region74
    $region73: #{tpu_custom_call.1} parent=1 // pred_region
      %210 = dma.done [#allocation8], 128
    $region74: #{tpu_custom_call.1} parent=1 // pred_fallthru
      _
    %211 = vsyncpa [#allocation8], 1
  %212 = vsyncmov [#allocation4]
  %s213 = vpop.sfrf %212
  %p214 = scmp.eq.s32.totalorder %s213, 0
  %p215 = pneg %p214
  %217 = shalt.err (%p215)

</llo_original>
